<compile_context>
chip_gen: v7x
topology: tpu7x:2x2x1
jax: 0.10.0
libtpu: 0.0.40
codegen_flags: <defaults>
</compile_context>

<pallas_src>
import jax
import jax.numpy as jnp
from jax import lax
from jax.experimental import pallas as pl
from jax.experimental.pallas import tpu as pltpu


# ---------------------------------------------------------------------------
# Stand-in for DataSpecification (vocabularies built in-script, deterministic)
# ---------------------------------------------------------------------------
class DataSpecification:
    AFFORDANCES = ["grasp", "cut", "contain", "support", "pound", "scoop"]
    MATERIALS = ["wood", "metal", "plastic", "glass", "ceramic"]


def build_vocabs():
    # TODO(synk): string->index dict lookup stays host-side (no Pallas equivalent).
    affordance_to_idx = {}
    material_to_idx = {}
    for aff in DataSpecification.AFFORDANCES:
        affordance_to_idx[aff] = len(affordance_to_idx)
    for mat in DataSpecification.MATERIALS:
        material_to_idx[mat] = len(material_to_idx)
    # reproduce the typo alias from the original module
    material_to_idx["platic"] = material_to_idx["plastic"]
    return affordance_to_idx, material_to_idx


def _round_up(x, m):
    return ((x + m - 1) // m) * m


# ---------------------------------------------------------------------------
# One-time parameter preprocessing (off the per-call hot path)
# ---------------------------------------------------------------------------
def precompute_part_encoder_tables(aff_emb, mat_emb, weight, bias):
    """Fuse embeddings into the linear weight once, lane-pad to 128.

    aff_emb : (n_aff, A) f32     mat_emb : (n_mat, M) f32
    weight  : (A+M, P) f32 (transpose of nn.Linear weight)   bias : (P,) f32
    returns : fused (V_pad, P_pad) f32, bias_pad (1, P_pad) f32, meta dict
    """
    n_aff, A = aff_emb.shape
    n_mat, M = mat_emb.shape
    P = weight.shape[1]
    P_pad = _round_up(P, 128)
    V = n_aff + n_mat
    V_pad = _round_up(V, 8)

    hi = lax.Precision.HIGHEST
    fused = jnp.concatenate(
        [jnp.dot(aff_emb.astype(jnp.float32), weight[:A].astype(jnp.float32),
                 precision=hi),
         jnp.dot(mat_emb.astype(jnp.float32), weight[A:A + M].astype(jnp.float32),
                 precision=hi)],
        axis=0)                                               # (V, P)
    fused = jnp.pad(fused, ((0, V_pad - V), (0, P_pad - P)))  # (V_pad, P_pad)
    bias_pad = jnp.pad(bias.astype(jnp.float32), (0, P_pad - P)).reshape(1, P_pad)
    meta = dict(n_aff=n_aff, n_mat=n_mat, P=P, P_pad=P_pad, V_pad=V_pad)
    return fused, bias_pad, meta


# ---------------------------------------------------------------------------
# Pallas kernel: two-hot @ fused-table + bias + ReLU (one MXU pass per block)
# ---------------------------------------------------------------------------
def _part_encoder_kernel(idx_ref,    # (TB, 2) int32: [aff_idx, n_aff + mat_idx]
                         fused_ref,  # (V_pad, P_pad) f32, resident
                         b_ref,      # (1, P_pad) f32, resident
                         out_ref):   # (TB, P_pad) f32
    TB = out_ref.shape[0]
    V_pad = fused_ref.shape[0]
    idx = idx_ref[...]                                           # (TB, 2)
    lanes = lax.broadcasted_iota(jnp.int32, (TB, V_pad), 1)      # (TB, V_pad)
    twohot = ((lanes == idx[:, 0:1]).astype(jnp.float32)
              + (lanes == idx[:, 1:2]).astype(jnp.float32))      # two 1s / row
    y = jnp.dot(twohot, fused_ref[...],
                preferred_element_type=jnp.float32) + b_ref[...]
    out_ref[...] = jnp.maximum(y, 0.0).astype(out_ref.dtype)


def part_encoder_pallas(aff_idx, mat_idx, fused, bias_pad, meta, *, block_b=None):
    """Batched PartEncoder forward.

    aff_idx, mat_idx : (B,) int32 indices
    fused, bias_pad, meta : from precompute_part_encoder_tables
    returns : (B, P) f32
    """
    B = aff_idx.shape[0]
    n_aff, n_mat = meta["n_aff"], meta["n_mat"]
    P, P_pad, V_pad = meta["P"], meta["P_pad"], meta["V_pad"]

    # Auto block size: fill MXU rows for large batches (cap 256), but keep
    # >= 2 grid steps when possible so both v7x TensorCores get work.
    B8 = _round_up(max(B, 1), 8)
    if block_b is None:
        if B8 <= 8:
            TB = 8
        else:
            TB = min(256, _round_up(pl.cdiv(B8, 2), 8))
    else:
        TB = block_b
    num_blocks = pl.cdiv(B8, TB)
    B_pad = num_blocks * TB

    # Clip indices (kernel has no bounds check); semantic difference from
    # nn.Embedding which would raise on OOB indices.
    aff_idx = jnp.clip(aff_idx.astype(jnp.int32), 0, n_aff - 1)
    mat_idx = jnp.clip(mat_idx.astype(jnp.int32), 0, n_mat - 1)
    idx = jnp.stack([aff_idx, mat_idx + n_aff], axis=1)          # (B, 2)
    # Padded batch rows get index V_pad -> all-zero two-hot row (sliced off).
    idx = jnp.pad(idx, ((0, B_pad - B), (0, 0)), constant_values=V_pad)

    grid_spec = pltpu.PrefetchScalarGridSpec(
        num_scalar_prefetch=0,
        grid=(num_blocks,),
        in_specs=[
            pl.BlockSpec((TB, 2), lambda i: (i, 0)),           # per-block indices
            pl.BlockSpec((V_pad, P_pad), lambda i: (0, 0)),    # resident fused table
            pl.BlockSpec((1, P_pad), lambda i: (0, 0)),        # resident bias
        ],
        out_specs=pl.BlockSpec((TB, P_pad), lambda i: (i, 0)),
    )

    out = pl.pallas_call(
        _part_encoder_kernel,
        out_shape=jax.ShapeDtypeStruct((B_pad, P_pad), jnp.float32),
        grid_spec=grid_spec,
        compiler_params=pltpu.CompilerParams(
            dimension_semantics=("parallel",)),
    )(idx, fused, bias_pad)

    return out[:B, :P]


# ---------------------------------------------------------------------------
# Main: deterministic params, batched run, check vs. plain-JAX reference
# ---------------------------------------------------------------------------
if __name__ == "__main__":
    affordance_embedding_dim = 16
    material_embedding_dim = 16
    part_encoder_dim = 32

    affordance_to_idx, material_to_idx = build_vocabs()
    n_aff = len(affordance_to_idx)
    n_mat = len(set(material_to_idx.values()))  # 'platic' aliases 'plastic'

    key = jax.random.PRNGKey(0)
    k1, k2, k3, k4 = jax.random.split(key, 4)

    aff_emb = jax.random.normal(k1, (n_aff, affordance_embedding_dim), jnp.float32)
    mat_emb = jax.random.normal(k2, (n_mat, material_embedding_dim), jnp.float32)
    in_dim = affordance_embedding_dim + material_embedding_dim
    # nn.Linear stores weight as (out, in); keep kernel-friendly (in, out) layout.
    weight = jax.random.normal(k3, (in_dim, part_encoder_dim), jnp.float32) * 0.1
    bias = jax.random.normal(k4, (part_encoder_dim,), jnp.float32) * 0.1

    # One-time parameter prep (fused table), off the hot path.
    fused, bias_pad, meta = precompute_part_encoder_tables(
        aff_emb, mat_emb, weight, bias)

    # Batch of parts = (affordance string, material string)
    parts = [
        ("cut", "platic"), ("grasp", "wood"), ("contain", "glass"),
        ("support", "metal"), ("pound", "ceramic"), ("scoop", "plastic"),
        ("grasp", "metal"), ("cut", "wood"), ("contain", "ceramic"),
        ("support", "plastic"), ("pound", "glass"), ("scoop", "metal"),
        ("grasp", "ceramic"), ("cut", "glass"), ("contain", "wood"),
        ("pound", "plastic"),
    ]
    aff_idx = jnp.array([affordance_to_idx[a] for a, _ in parts], jnp.int32)
    mat_idx = jnp.array([material_to_idx[m] for _, m in parts], jnp.int32)

    out = part_encoder_pallas(aff_idx, mat_idx, fused, bias_pad, meta)
    out = jax.block_until_ready(out)

    # Plain-JAX reference (same semantics as the PyTorch forward, per row).
    cat = jnp.concatenate([aff_emb[aff_idx], mat_emb[mat_idx]], axis=1)
    ref = jnp.maximum(
        jnp.dot(cat, weight, precision=lax.Precision.HIGHEST) + bias, 0.0)

    assert out.shape == (len(parts), part_encoder_dim)
    assert jnp.allclose(out, ref, atol=1e-5, rtol=1e-5), "mismatch vs reference"
    print("KERNEL_OK")
</pallas_src>

<mosaic_0001>
module attributes {stable_mosaic.version = 11 : i64} {
  func.func @_part_encoder_kernel(%arg0: i32, %arg1: memref<8x2xi32, #tpu.memory_space<vmem>>, %arg2: memref<16x128xf32, #tpu.memory_space<vmem>>, %arg3: memref<1x128xf32, #tpu.memory_space<vmem>>, %arg4: memref<8x128xf32, #tpu.memory_space<vmem>>) attributes {dimension_semantics = [#tpu.dimension_semantics<parallel>], iteration_bounds = array<i64: 2>, scalar_prefetch = 0 : i64, scratch_operands = 0 : i64, tpu.core_type = #tpu.core_type<tc>, window_params = [{transform_indices = @transform_0, window_bounds = array<i64: 8, 2>}, {pipeline_mode = #tpu.pipeline_mode<synchronous>, transform_indices = @transform_1, window_bounds = array<i64: 16, 128>}, {pipeline_mode = #tpu.pipeline_mode<synchronous>, transform_indices = @transform_2, window_bounds = array<i64: 1, 128>}, {transform_indices = @transform_3, window_bounds = array<i64: 8, 128>}]} {
    %c0 = arith.constant 0 : index
    %c0_0 = arith.constant 0 : index
    %0 = vector.load %arg1[%c0, %c0_0] : memref<8x2xi32, #tpu.memory_space<vmem>>, vector<8x2xi32>
    %1 = tpu.iota {dimensions = array<i32: 1>} : vector<8x16xi32>
    %2 = vector.extract_strided_slice %0 {offsets = [0, 0], sizes = [8, 1], strides = [1, 1]} : vector<8x2xi32> to vector<8x1xi32>
    %3 = vector.broadcast %2 : vector<8x1xi32> to vector<8x16xi32>
    %4 = arith.cmpi eq, %1, %3 : vector<8x16xi32>
    %5 = arith.extui %4 : vector<8x16xi1> to vector<8x16xi32>
    %6 = arith.sitofp %5 : vector<8x16xi32> to vector<8x16xf32>
    %7 = vector.extract_strided_slice %0 {offsets = [0, 1], sizes = [8, 1], strides = [1, 1]} : vector<8x2xi32> to vector<8x1xi32>
    %8 = vector.broadcast %7 : vector<8x1xi32> to vector<8x16xi32>
    %9 = arith.cmpi eq, %1, %8 : vector<8x16xi32>
    %10 = arith.extui %9 : vector<8x16xi1> to vector<8x16xi32>
    %11 = arith.sitofp %10 : vector<8x16xi32> to vector<8x16xf32>
    %12 = arith.addf %6, %11 : vector<8x16xf32>
    %c0_1 = arith.constant 0 : index
    %c0_2 = arith.constant 0 : index
    %13 = vector.load %arg2[%c0_1, %c0_2] : memref<16x128xf32, #tpu.memory_space<vmem>>, vector<16x128xf32>
    %cst = arith.constant dense<0.000000e+00> : vector<8x128xf32>
    %14 = tpu.matmul %12, %13, %cst {dimension_numbers = #tpu.dot_dimension_numbers<[1], [0], [0], [1], [0, 0, 1, 1], [], []>} : vector<8x16xf32>, vector<16x128xf32>, vector<8x128xf32> -> vector<8x128xf32>
    %c0_3 = arith.constant 0 : index
    %c0_4 = arith.constant 0 : index
    %15 = vector.load %arg3[%c0_3, %c0_4] : memref<1x128xf32, #tpu.memory_space<vmem>>, vector<1x128xf32>
    %16 = vector.broadcast %15 : vector<1x128xf32> to vector<8x128xf32>
    %17 = arith.addf %14, %16 : vector<8x128xf32>
    %cst_5 = arith.constant 0.000000e+00 : f32
    %18 = vector.broadcast %cst_5 : f32 to vector<8x128xf32>
    %19 = arith.maximumf %17, %18 : vector<8x128xf32>
    %c0_6 = arith.constant 0 : index
    %c0_7 = arith.constant 0 : index
    %20 = vector.load %arg4[%c0_6, %c0_7] : memref<8x128xf32, #tpu.memory_space<vmem>>, vector<8x128xf32>
    tpu.vector_store %arg4[%c0_6, %c0_7], %19 {strides = array<i32>} : memref<8x128xf32, #tpu.memory_space<vmem>>, vector<8x128xf32>,
    return
  }
  func.func @transform_0(%arg0: i32) -> (i32, i32) {
    %c0_i32 = arith.constant 0 : i32
    %c0_i32_0 = arith.constant 0 : i32
    return %arg0, %c0_i32 : i32, i32
  }
  func.func @transform_1(%arg0: i32) -> (i32, i32) {
    %c0_i32 = arith.constant 0 : i32
    %c0_i32_0 = arith.constant 0 : i32
    %c0_i32_1 = arith.constant 0 : i32
    return %c0_i32, %c0_i32_0 : i32, i32
  }
  func.func @transform_2(%arg0: i32) -> (i32, i32) {
    %c0_i32 = arith.constant 0 : i32
    %c0_i32_0 = arith.constant 0 : i32
    %c0_i32_1 = arith.constant 0 : i32
    return %c0_i32, %c0_i32_0 : i32, i32
  }
  func.func @transform_3(%arg0: i32) -> (i32, i32) {
    %c0_i32 = arith.constant 0 : i32
    %c0_i32_0 = arith.constant 0 : i32
    return %arg0, %c0_i32 : i32, i32
  }
}

</mosaic_0001>

<llo_original>
// kernel: tpu_custom_call.1
$region0: #{tpu_custom_call.1}
  #allocation0 [shape = 'u32[]', space=smem, size = 0x4, offset = 0x4, fixed_abs, tag = 'smem constant byte address 0x4 - core index']
  #allocation1 [shape = 'u32[144,128]{1,0:T(1,128)}', space=vmem, size = 0x12000, scoped, tag = 'internal scratch']
  %s0 = inlined_call_operand.vmem [shape: s32[16,2], index: 0, kind: input, shape index: {}]
  %s1 = inlined_call_operand.vmem [shape: f32[16,128], index: 1, kind: input, shape index: {}]
  %s2 = inlined_call_operand.vmem [shape: f32[1,128], index: 2, kind: input, shape index: {}]
  %s3 = inlined_call_operand.hbm [shape: f32[16,128], index: 3, kind: output, shape index: {}]
  %s4 = sld [smem:[#allocation0]]
  $region45: #{tpu_custom_call.1} parent=0
    _
  %s6 = ssub.s32 1, %s4
  %s7 = scalar_select 0, %s6, %s4
  $region1: #{tpu_custom_call.1} parent=0
    #allocation2 [shape = 'u8[8192]{0}', space=vmem, size = 0x2000, scoped, tag = 'output window, operand 0']
    #allocation3 [shape = 's32[2]{0}', space=sflag, size = 0x8, scoped, tag = 'scoped memory for tpu_custom_call.1']
    %8 = vsyncpa [#allocation3], 0
    %s9 = scalar_lea.sflag [#allocation3], 1
    %10 = vsyncpa %s9, 0
    loop: start=0, step=1, limit=4
    $region2: #{tpu_custom_call.1} parent=1 // loop_pre_header
      _
    $region3: #{tpu_custom_call.1} parent=1 // loop_header
      %s12 = sphi 0, %s16
      %p13 = scmp.ge.s32.totalorder %s12, 4
      %s22 = sphi 0, %s24
      %s25 = sphi 0, %s22
      %s26 = sphi 0, %s25
      %s42 = sphi 0, %s26
      %s46 = sphi 0, %s46
      %s48 = sphi 0, %s46
      %s49 = sphi 0, %s48
      %s63 = sphi 0, %s49
      %s67 = sphi 0, %s67
      %s69 = sphi 0, %s67
      %s70 = sphi 0, %s69
      %s84 = sphi 0, %s70
      %s90 = sphi 0, %s92
      %s93 = sphi 0, %s90
      %s94 = sphi 0, %s93
      %s110 = sphi 0, %s94
    $region4: #{tpu_custom_call.1} parent=1 // loop_header_branch
      %15 = sbr.rel (%p13) target = $region8
    $region5: #{tpu_custom_call.1} parent=1 // loop_body
      %s17 = ssub.s32 %s12, 1
      %s18 = ssub.s32 %s12, 2
      %s19 = sadd.s32 %s12, 1
      %s20 = ssub.s32 %s12, %s19
      %p21 = scmp.eq.s32.totalorder %s20, 0
      %s23 = sadd.s32 %s22, 1
      %s24 = scalar_select %p21, %s22, %s23
      %p27 = pneg %p21
      %p28 = scmp.eq.s32.totalorder %s12, 1
      %p29 = por %p27, %p28
      %p30 = scmp.ne.s32.totalorder %s22, %s25
      %p31 = scmp.eq.s32.totalorder %s12, 0
      %p32 = por %p30, %p31
      %p33 = scmp.ne.s32.totalorder %s22, %s25
      %p34 = scmp.eq.s32.totalorder %s17, 1
      %p35 = por %p33, %p34
      %p36 = scmp.ne.s32.totalorder %s25, %s26
      %p37 = scmp.eq.s32.totalorder %s17, 0
      %p38 = por %p36, %p37
      %p39 = scmp.ne.s32.totalorder %s25, %s26
      %p40 = scmp.eq.s32.totalorder %s18, 1
      %p41 = por %p39, %p40
      %p43 = scmp.ne.s32.totalorder %s26, %s42
      %p44 = scmp.eq.s32.totalorder %s18, 0
      %p45 = por %p43, %p44
      %s47 = sadd.s32 %s46, 1
      %p50 = scmp.eq.s32.totalorder %s12, 1
      %p51 = scmp.ne.s32.totalorder %s46, %s48
      %p52 = scmp.eq.s32.totalorder %s12, 0
      %p53 = por %p51, %p52
      %p54 = scmp.ne.s32.totalorder %s46, %s48
      %p55 = scmp.eq.s32.totalorder %s17, 1
      %p56 = por %p54, %p55
      %p57 = scmp.ne.s32.totalorder %s48, %s49
      %p58 = scmp.eq.s32.totalorder %s17, 0
      %p59 = por %p57, %p58
      %p60 = scmp.ne.s32.totalorder %s48, %s49
      %p61 = scmp.eq.s32.totalorder %s18, 1
      %p62 = por %p60, %p61
      %p64 = scmp.ne.s32.totalorder %s49, %s63
      %p65 = scmp.eq.s32.totalorder %s18, 0
      %p66 = por %p64, %p65
      %s68 = sadd.s32 %s67, 1
      %p71 = scmp.eq.s32.totalorder %s12, 1
      %p72 = scmp.ne.s32.totalorder %s67, %s69
      %p73 = scmp.eq.s32.totalorder %s12, 0
      %p74 = por %p72, %p73
      %p75 = scmp.ne.s32.totalorder %s67, %s69
      %p76 = scmp.eq.s32.totalorder %s17, 1
      %p77 = por %p75, %p76
      %p78 = scmp.ne.s32.totalorder %s69, %s70
      %p79 = scmp.eq.s32.totalorder %s17, 0
      %p80 = por %p78, %p79
      %p81 = scmp.ne.s32.totalorder %s69, %s70
      %p82 = scmp.eq.s32.totalorder %s18, 1
      %p83 = por %p81, %p82
      %p85 = scmp.ne.s32.totalorder %s70, %s84
      %p86 = scmp.eq.s32.totalorder %s18, 0
      %p87 = por %p85, %p86
      %s88 = ssub.s32 %s12, %s19
      %p89 = scmp.eq.s32.totalorder %s88, 0
      %s91 = sadd.s32 %s90, 1
      %s92 = scalar_select %p89, %s90, %s91
      %p95 = pneg %p89
      %p96 = scmp.eq.s32.totalorder %s12, 1
      %p97 = por %p95, %p96
      %p98 = scmp.ne.s32.totalorder %s90, %s93
      %p99 = scmp.eq.s32.totalorder %s12, 0
      %p100 = por %p98, %p99
      %p101 = scmp.ne.s32.totalorder %s90, %s93
      %p102 = scmp.eq.s32.totalorder %s17, 1
      %p103 = por %p101, %p102
      %p104 = scmp.ne.s32.totalorder %s93, %s94
      %p105 = scmp.eq.s32.totalorder %s17, 0
      %p106 = por %p104, %p105
      %p107 = scmp.ne.s32.totalorder %s93, %s94
      %p108 = scmp.eq.s32.totalorder %s18, 1
      %p109 = por %p107, %p108
      %p111 = scmp.ne.s32.totalorder %s94, %s110
      %p112 = scmp.eq.s32.totalorder %s18, 0
      %p113 = por %p111, %p112
      %p114 = scmp.le.s32.totalorder 1, %s12
      %p115 = scmp.lt.s32.totalorder %s12, 3
      %p116 = pnand %p114, %p115
      %p117 = pneg %p116
      // Predicated region
      $region9: #{tpu_custom_call.1} parent=5 // pred_check
        _
      $region10: #{tpu_custom_call.1} parent=5 // pred_check_branch
        %119 = sbr.rel (%p116) target = $region12
      $region11: #{tpu_custom_call.1} parent=5 // pred_region
        %s120 = ssub.s32 %s12, 1
        // Predicated region
        $region13: #{tpu_custom_call.1} parent=11 // pred_check
          %p121 = pneg %p59
        $region14: #{tpu_custom_call.1} parent=11 // pred_check_branch
          %123 = sbr.rel (%p121) target = $region16
        $region15: #{tpu_custom_call.1} parent=11 // pred_region
          _
        $region16: #{tpu_custom_call.1} parent=11 // pred_fallthru
          _
        // Predicated region
        $region17: #{tpu_custom_call.1} parent=11 // pred_check
          %p124 = pneg %p80
        $region18: #{tpu_custom_call.1} parent=11 // pred_check_branch
          %126 = sbr.rel (%p124) target = $region20
        $region19: #{tpu_custom_call.1} parent=11 // pred_region
          _
        $region20: #{tpu_custom_call.1} parent=11 // pred_fallthru
          _
      $region12: #{tpu_custom_call.1} parent=5 // pred_fallthru
        _
      %p127 = scmp.lt.s32.totalorder %s12, 2
      // Predicated region
      $region21: #{tpu_custom_call.1} parent=5 // pred_check
        %p128 = pneg %p127
      $region22: #{tpu_custom_call.1} parent=5 // pred_check_branch
        %130 = sbr.rel (%p128) target = $region24
      $region23: #{tpu_custom_call.1} parent=5 // pred_region
        // Predicated region
        $region25: #{tpu_custom_call.1} parent=23 // pred_check
          %p131 = pneg %p32
        $region26: #{tpu_custom_call.1} parent=23 // pred_check_branch
          %133 = sbr.rel (%p131) target = $region28
        $region27: #{tpu_custom_call.1} parent=23 // pred_region
          %p134 = scmp.lt.s32.totalorder %s12, 1
          %s135 = scalar_select %p134, %s12, 1
          %s136 = smul.addr %s135, 8
          %s137 = scalar_lea.vmem %s0, %s136
        $region28: #{tpu_custom_call.1} parent=23 // pred_fallthru
          _
      $region24: #{tpu_custom_call.1} parent=5 // pred_fallthru
        _
      %p138 = scmp.le.s32.totalorder 1, %s12
      %p139 = scmp.lt.s32.totalorder %s12, 3
      %p140 = pnand %p138, %p139
      %p141 = pneg %p140
      // Predicated region
      $region29: #{tpu_custom_call.1} parent=5 // pred_check
        _
      $region30: #{tpu_custom_call.1} parent=5 // pred_check_branch
        %143 = sbr.rel (%p140) target = $region32
      $region31: #{tpu_custom_call.1} parent=5 // pred_region
        %s144 = ssub.s32 %s12, 1
        %p145 = scmp.lt.s32.totalorder %s17, 1
        %s146 = scalar_select %p145, %s17, 1
        %s147 = smul.addr %s146, 8
        %s148 = scalar_lea.vmem %s0, %s147
        %p149 = pneg %p38
        %p150 = pneg %p35
        %p151 = pneg %p59
        %p152 = pneg %p56
        %p153 = pneg %p80
        %p154 = pneg %p77
        %p155 = pneg %p106
        %p156 = pneg %p103
        %s157 = sand.u32 %s93, 1
        %s158 = scalar_lea.sflag [#allocation3], %s157
        %s159 = sand.u32 %s93, 1
        %s160 = smul.addr %s159, 8
        %s161 = scalar_lea.vmem [#allocation2], %s160
        %p162 = scmp.lt.s32.totalorder %s17, 1
        %s163 = scalar_select %p162, %s17, 1
        %s164 = smul.addr %s163, 8
        %s165 = scalar_lea.vmem %s0, %s164
        %v166 = vld [vmem:[%s165] sm:$0xff]
        %v167 = vlaneseq
        %v168 = vand.u32 %v167, 127
        %169 = vset.pattern.permute.xlu0 0
        %170 = vperm.xlu0 %169, %v166
        %v171 = vpop.permute.xlu0 %170
        %vm172 = vcmp.eq.s32.totalorder %v168, %v171
        %v173 = vsel %vm172, 1, 0
        %v174 = vcvt.s32.f32 %v173
        %175 = vset.pattern.permute.xlu0 1
        %176 = vperm.xlu0 %175, %v166
        %v177 = vpop.permute.xlu0 %176
        %vm178 = vcmp.eq.s32.totalorder %v168, %v177
        %v179 = vsel %vm178, 1, 0
        %v180 = vcvt.s32.f32 %v179
        %v181 = vadd.f32 %v174, %v180
        %v182 = vld [vmem:[%s1] sm:$0xff]
        %v183 = vld [vmem:[%s1 + $0x8] sm:$0xff]
        %v184 = vld [vmem:[%s2] sm:$0x1]
        %v186 = vlaneseq
        %v187 = vshrl.u32 %v186, 7
        %v188 = vsub.s32 0, %v187
        %v189 = vrot.slane %v184, %v188
        %vm191 = vcmask 130048
        %v193 = vsel %vm191, %v181, 0
        %195 = vmatprep.subr.mxu0 0.0
        %196 = vmatpush1.msra.mxu0 %v182
        %197 = vmatprep.subr.mxu0 0.0
        %198 = vmatpush1.msra.mxu0 %v183
        %199 = vmatprep.subr.mxu0 0.0
        %200 = vmatpush1.msra.mxu0 0.0
        %201 = vmatprep.subr.mxu0 0.0
        %202 = vmatpush1.msra.mxu0 0.0
        %203 = vmatprep.subr.mxu0 0.0
        %204 = vmatpush1.msra.mxu0 0.0
        %205 = vmatprep.subr.mxu0 0.0
        %206 = vmatpush1.msra.mxu0 0.0
        %207 = vmatprep.subr.mxu0 0.0
        %208 = vmatpush1.msra.mxu0 0.0
        %209 = vmatprep.subr.mxu0 0.0
        %210 = vmatpush1.msra.mxu0 0.0
        %211 = vmatprep.subr.mxu0 0.0
        %212 = vmatpush1.msra.mxu0 0.0
        %213 = vmatprep.subr.mxu0 0.0
        %214 = vmatpush1.msra.mxu0 0.0
        %215 = vmatprep.subr.mxu0 0.0
        %216 = vmatpush1.msra.mxu0 0.0
        %217 = vmatprep.subr.mxu0 0.0
        %218 = vmatpush1.msra.mxu0 0.0
        %219 = vmatprep.subr.mxu0 0.0
        %220 = vmatpush1.msra.mxu0 0.0
        %221 = vmatprep.subr.mxu0 0.0
        %222 = vmatpush1.msra.mxu0 0.0
        %223 = vmatprep.subr.mxu0 0.0
        %224 = vmatpush1.msra.mxu0 0.0
        %225 = vmatprep.subr.mxu0 0.0
        %226 = vmatpush1.msra.mxu0 0.0
        %227 = vmatprep.subr.mxu0 0.0
        %228 = vmatpush1.msra.mxu0 0.0
        %229 = vmatprep.subr.mxu0 0.0
        %230 = vmatpush1.msra.mxu0 0.0
        %231 = vmatprep.subr.mxu0 0.0
        %232 = vmatpush1.msra.mxu0 0.0
        %233 = vmatprep.subr.mxu0 0.0
        %234 = vmatpush1.msra.mxu0 0.0
        %235 = vmatprep.subr.mxu0 0.0
        %236 = vmatpush1.msra.mxu0 0.0
        %237 = vmatprep.subr.mxu0 0.0
        %238 = vmatpush1.msra.mxu0 0.0
        %239 = vmatprep.subr.mxu0 0.0
        %240 = vmatpush1.msra.mxu0 0.0
        %241 = vmatprep.subr.mxu0 0.0
        %242 = vmatpush1.msra.mxu0 0.0
        %243 = vmatprep.subr.mxu0 0.0
        %244 = vmatpush1.msra.mxu0 0.0
        %245 = vmatprep.subr.mxu0 0.0
        %246 = vmatpush1.msra.mxu0 0.0
        %247 = vmatprep.subr.mxu0 0.0
        %248 = vmatpush1.msra.mxu0 0.0
        %249 = vmatprep.subr.mxu0 0.0
        %250 = vmatpush1.msra.mxu0 0.0
        %251 = vmatprep.subr.mxu0 0.0
        %252 = vmatpush1.msra.mxu0 0.0
        %253 = vmatprep.subr.mxu0 0.0
        %254 = vmatpush1.msra.mxu0 0.0
        %255 = vmatprep.subr.mxu0 0.0
        %256 = vmatpush1.msra.mxu0 0.0
        %257 = vmatprep.subr.mxu0 0.0
        %258 = vmatpush1.msra.mxu0 0.0
        %259 = vmatprep.mubr.f32.mxu0 0.0
        %260 = vmatmul.mubr.f32.gmra.mrb[0].mxu0 %v193
        %v261 = vpop.f32.mrb[0].mxu0
        %v262 = vadd.f32 %v189, %v261
        %v263 = vpop.f32.mrb[0].mxu0
        %264 = vdwg.mxu0
        %v265 = vmax.f32 %v262, 0.0
        %266 = vst [vmem:[%s161] sm:$0xff] %v265
        %s267 = sand.u32 %s93, 1
        %s268 = scalar_lea.sflag [#allocation3], %s267
        %s269 = sand.u32 %s93, 1
        %s270 = smul.addr %s269, 8
        %s271 = scalar_lea.vmem [#allocation2], %s270
        // Predicated region
        $region33: #{tpu_custom_call.1} parent=31 // pred_check
          %p272 = pneg %p103
        $region34: #{tpu_custom_call.1} parent=31 // pred_check_branch
          %274 = sbr.rel (%p272) target = $region36
        $region35: #{tpu_custom_call.1} parent=31 // pred_region
          %s276 = ssub.s32 128, 128
          %277 = vsyncadd %s268, %s276
          %s278 = smul.addr %s17, 128
          %s279 = scalar_lea.hbm %s3, %s278
          %s281 = sshll.u32 %s271, 4
          %s282 = int_to_ptr.vmem [resolvable:$true] %s281
          %284 = dma.vmem_to_hbm [thread:$0]  %s282, 128, %s279, %s268
        $region36: #{tpu_custom_call.1} parent=31 // pred_fallthru
          _
      $region32: #{tpu_custom_call.1} parent=5 // pred_fallthru
        _
      %p285 = scmp.le.s32.totalorder 2, %s12
      // Predicated region
      $region37: #{tpu_custom_call.1} parent=5 // pred_check
        %p286 = pneg %p285
      $region38: #{tpu_custom_call.1} parent=5 // pred_check_branch
        %288 = sbr.rel (%p286) target = $region40
      $region39: #{tpu_custom_call.1} parent=5 // pred_region
        %s289 = ssub.s32 %s12, 2
        // Predicated region
        $region41: #{tpu_custom_call.1} parent=39 // pred_check
          %p290 = pneg %p109
        $region42: #{tpu_custom_call.1} parent=39 // pred_check_branch
          %292 = sbr.rel (%p290) target = $region44
        $region43: #{tpu_custom_call.1} parent=39 // pred_region
          %s293 = sand.u32 %s94, 1
          %s294 = scalar_lea.sflag [#allocation3], %s293
          %s295 = sand.u32 %s94, 1
          %s296 = smul.addr %s295, 8
          %s297 = scalar_lea.vmem [#allocation2], %s296
          %298 = dma.done %s294, 128
        $region44: #{tpu_custom_call.1} parent=39 // pred_fallthru
          _
      $region40: #{tpu_custom_call.1} parent=5 // pred_fallthru
        _
    $region6: #{tpu_custom_call.1} parent=1 // loop_footer
      %s16 = sadd.s32 1, %s12
    $region7: #{tpu_custom_call.1} parent=1 // loop_footer_branch
      %11 = sbr.rel target = $region3
    $region8: #{tpu_custom_call.1} parent=1 // loop_exit
      _
    %299 = vsyncpa [#allocation3], 1
    %s300 = scalar_lea.sflag [#allocation3], 1
    %301 = vsyncpa %s300, 1

</llo_original>
